<compile_context>
chip_gen: v6e
topology: v6e:2x2x1
jax: 0.10.0
libtpu: 0.0.40
codegen_flags: <defaults>
</compile_context>

<pallas_src>
import functools

import jax
import jax.numpy as jnp
from jax.experimental import pallas as pl
from jax.experimental.pallas import tpu as pltpu


# ----------------------------------------------------------------------------
# Pallas kernel
# ----------------------------------------------------------------------------
def _gumbel_sampler_kernel(alpha_ref, u_ref, u2_ref,
                           yhard_ref, sg_ref, ss_ref, pos_ref,
                           *, temp: float, scaling: float,
                           grid_size_out: int, side: int, eps: float = 1e-10):
    alpha = alpha_ref[...]                       # (tb, N) logits, f32
    u = u_ref[...]                               # (tb, N) uniform [0,1)
    tb, n = alpha.shape

    # --- gumbel noise:  g = -log(eps - log(u + eps))   (sample_gumbel_like) ---
    g = -jnp.log(eps - jnp.log(u + eps))

    # --- gumbel softmax (soft samples) ---------------------------------------
    z = (alpha + g) * (1.0 / temp)
    zmax = jnp.max(z, axis=1, keepdims=True)
    ez = jnp.exp(z - zmax)
    inv_lg = 1.0 / jnp.sum(ez, axis=1, keepdims=True)    # exact per-row reciprocal
    sg = jnp.maximum(ez * inv_lg, eps)                    # torch.max(soft, eps)

    # --- plain softmax of the logits -----------------------------------------
    amax = jnp.max(alpha, axis=1, keepdims=True)
    ea = jnp.exp(alpha - amax)
    inv_la = 1.0 / jnp.sum(ea, axis=1, keepdims=True)
    ss = ea * inv_la

    # --- hard one-hot: argmax of z (== argmax of soft gumbel; softmax is monotone)
    iota_n = jax.lax.broadcasted_iota(jnp.int32, (tb, n), 1)
    first_idx = jnp.min(jnp.where(z == zmax, iota_n, n), axis=1, keepdims=True)
    y_hard = (iota_n == first_idx).astype(alpha.dtype)

    # --- per-row coordinates straight from first_idx (no (2tb,N) map) ---------
    # gumbel_map[m, 0] = m %  side - G   (column), gumbel_map[m, 1] = m // side - G
    # float-based div/mod (no vector integer div on TPU); exact for N < 2^24,
    # the +0.5 nudge makes floor robust to reciprocal rounding.
    idx_f = first_idx.astype(jnp.float32)                 # (tb, 1)
    rowf = jnp.floor((idx_f + 0.5) * (1.0 / float(side)))
    colf = idx_f - rowf * float(side)
    g_off = float(grid_size_out)
    pos_x = (colf - g_off + u2_ref[:, 0:1]) * scaling     # coord 0 (x2 / column)
    pos_y = (rowf - g_off + u2_ref[:, 1:2]) * scaling     # coord 1 (x1 / row)

    yhard_ref[...] = y_hard
    sg_ref[...] = sg
    ss_ref[...] = ss
    pos_ref[:, 0:1] = pos_x                               # static lane-slice stores
    pos_ref[:, 1:2] = pos_y


# ----------------------------------------------------------------------------
# Wrapper: noise generation, tiling, pallas_call, reshape glue
# ----------------------------------------------------------------------------
def _pick_batch_tile(b: int):
    """Row tile (multiple of 8, <= 128) and padded batch.

    Guarantees >= 2 grid steps whenever b >= 16 (keeps both v7x TCs busy) and
    never falls back to tb == b for large awkward batch sizes.
    """
    if b <= 8:
        return b, b                                        # single full block
    tb = min(128, ((pl.cdiv(b, 2) + 7) // 8) * 8)          # ~half batch, 8-aligned
    bp = pl.cdiv(b, tb) * tb                               # pad to multiple of tb
    return tb, bp


def gumbel_sampler_forward(pos_map, key, *, temp=1.0, grid_size_out=16,
                           scaling=0.5):
    """Mirrors GumbelSampler.forward (force_hard=True path).

    pos_map: (B, C, H, W) float32 == cnn_out['PosMap'].
    Returns (final_pos, final_pos_map, y_softmax_gumbel, y_softmax, y_scores).
    """
    b, c, hh, w = pos_map.shape
    side = 2 * grid_size_out + 1
    n = c * hh * w
    assert n == side * side, "PosMap flattened size must equal (2*grid_size_out+1)^2"

    y_scores = pos_map.reshape(b, n).astype(jnp.float32)

    tb, bp = _pick_batch_tile(b)
    grid = (bp // tb,)

    # Noise drawn in the wrapper (portable: no TPU-only PRNG primitives in-kernel).
    k_g, k_pos = jax.random.split(key)
    u = jax.random.uniform(k_g, (bp, n), dtype=jnp.float32)    # gumbel uniforms
    u2 = jax.random.uniform(k_pos, (bp, 2), dtype=jnp.float32)  # coord jitter

    alpha = y_scores if bp == b else jnp.pad(y_scores, ((0, bp - b), (0, 0)))

    kernel = functools.partial(_gumbel_sampler_kernel,
                               temp=float(temp), scaling=float(scaling),
                               grid_size_out=int(grid_size_out), side=int(side))

    row_spec = pl.BlockSpec((tb, n), lambda i: (i, 0))
    pos_spec = pl.BlockSpec((tb, 2), lambda i: (i, 0))

    y_hard, sg, ss, pos = pl.pallas_call(
        kernel,
        out_shape=(
            jax.ShapeDtypeStruct((bp, n), jnp.float32),   # final_pos_map (flat)
            jax.ShapeDtypeStruct((bp, n), jnp.float32),   # y_softmax_gumbel (flat)
            jax.ShapeDtypeStruct((bp, n), jnp.float32),   # y_softmax (flat)
            jax.ShapeDtypeStruct((bp, 2), jnp.float32),   # final_pos, scaled
        ),
        grid=grid,
        in_specs=[row_spec, row_spec, pos_spec],
        out_specs=(row_spec, row_spec, row_spec, pos_spec),
        compiler_params=pltpu.CompilerParams(
            dimension_semantics=("parallel",)),
    )(alpha, u, u2)

    if bp != b:                                            # drop batch padding
        y_hard, sg, ss, pos = y_hard[:b], sg[:b], ss[:b], pos[:b]

    final_pos = pos[None, :, :]                            # (1, B, 2)
    final_pos_map = y_hard.reshape(b, c, hh, w)
    y_softmax_gumbel = sg.reshape(b, c, hh, w)
    y_softmax = ss.reshape(b, c, hh, w)
    return final_pos, final_pos_map, y_softmax_gumbel, y_softmax, y_scores


# ----------------------------------------------------------------------------
if __name__ == "__main__":
    key = jax.random.PRNGKey(0)
    k_in, k_noise = jax.random.split(key)

    grid_size_out = 16                 # module default -> N = 33*33 = 1089
    B, C, H, W = 2, 1, 33, 33          # C*H*W == (2*grid_size_out+1)^2
    pos_map = jax.random.normal(k_in, (B, C, H, W), dtype=jnp.float32)

    outs = gumbel_sampler_forward(pos_map, k_noise, temp=1.0,
                                  grid_size_out=grid_size_out, scaling=0.5)
    outs = jax.block_until_ready(outs)

    final_pos, final_pos_map, y_sg, y_s, y_scores = outs
    # shape contract
    assert final_pos.shape == (1, B, 2)
    assert final_pos_map.shape == (B, C, H, W)
    assert y_sg.shape == (B, C, H, W)
    assert y_s.shape == (B, C, H, W)
    assert y_scores.shape == (B, C * H * W)
    # hard samples are exact one-hot rows
    flat_hard = final_pos_map.reshape(B, -1)
    assert jnp.allclose(flat_hard.sum(axis=1), 1.0)
    assert jnp.allclose(flat_hard.max(axis=1), 1.0)
    # softmaxes sum to 1 at f32 accuracy (exact per-row reciprocal)
    assert jnp.all(jnp.abs(y_sg.reshape(B, -1).sum(axis=1) - 1.0) < 1e-4)
    assert jnp.all(jnp.abs(y_s.reshape(B, -1).sum(axis=1) - 1.0) < 1e-4)
    # plain softmax matches the reference computation
    ref_softmax = jax.nn.softmax(y_scores, axis=-1)
    assert jnp.allclose(y_s.reshape(B, -1), ref_softmax, atol=1e-5)
    # sampled positions fall inside the scaled grid range
    assert jnp.all(jnp.abs(final_pos) <= (grid_size_out + 1) * 0.5 + 1e-3)
    # pos is consistent with the argmax cell of the hard map (within jitter)
    idx = jnp.argmax(flat_hard, axis=1)
    col = (idx % (2 * grid_size_out + 1)) - grid_size_out
    row = (idx // (2 * grid_size_out + 1)) - grid_size_out
    base = jnp.stack([col, row], axis=-1).astype(jnp.float32) * 0.5
    assert jnp.all((final_pos[0] - base >= -1e-4) & (final_pos[0] - base <= 0.5 + 1e-4))

    print("KERNEL_OK")
</pallas_src>

<mosaic_0001>
module attributes {stable_mosaic.version = 11 : i64} {
  func.func @_gumbel_sampler_kernel(%arg0: i32, %arg1: memref<2x1089xf32, #tpu.memory_space<vmem>>, %arg2: memref<2x1089xf32, #tpu.memory_space<vmem>>, %arg3: memref<2x2xf32, #tpu.memory_space<vmem>>, %arg4: memref<2x1089xf32, #tpu.memory_space<vmem>>, %arg5: memref<2x1089xf32, #tpu.memory_space<vmem>>, %arg6: memref<2x1089xf32, #tpu.memory_space<vmem>>, %arg7: memref<2x2xf32, #tpu.memory_space<vmem>>) attributes {dimension_semantics = [#tpu.dimension_semantics<parallel>], iteration_bounds = array<i64: 1>, scalar_prefetch = 0 : i64, scratch_operands = 0 : i64, tpu.core_type = #tpu.core_type<tc>, window_params = [{transform_indices = @transform_0, window_bounds = array<i64: 2, 1089>}, {transform_indices = @transform_1, window_bounds = array<i64: 2, 1089>}, {transform_indices = @transform_2, window_bounds = array<i64: 2, 2>}, {transform_indices = @transform_3, window_bounds = array<i64: 2, 1089>}, {transform_indices = @transform_4, window_bounds = array<i64: 2, 1089>}, {transform_indices = @transform_5, window_bounds = array<i64: 2, 1089>}, {transform_indices = @transform_6, window_bounds = array<i64: 2, 2>}]} {
    %c0 = arith.constant 0 : index
    %c0_0 = arith.constant 0 : index
    %0 = vector.load %arg1[%c0, %c0_0] : memref<2x1089xf32, #tpu.memory_space<vmem>>, vector<2x1089xf32>
    %c0_1 = arith.constant 0 : index
    %c0_2 = arith.constant 0 : index
    %1 = vector.load %arg2[%c0_1, %c0_2] : memref<2x1089xf32, #tpu.memory_space<vmem>>, vector<2x1089xf32>
    %cst = arith.constant 1.000000e-10 : f32
    %2 = vector.broadcast %cst : f32 to vector<2x1089xf32>
    %3 = arith.addf %1, %2 : vector<2x1089xf32>
    %4 = math.log %3 : vector<2x1089xf32>
    %cst_3 = arith.constant 1.000000e-10 : f32
    %5 = vector.broadcast %cst_3 : f32 to vector<2x1089xf32>
    %6 = arith.subf %5, %4 : vector<2x1089xf32>
    %7 = math.log %6 : vector<2x1089xf32>
    %cst_4 = arith.constant 0.000000e+00 : f32
    %8 = vector.broadcast %cst_4 : f32 to vector<2x1089xf32>
    %9 = arith.subf %8, %7 : vector<2x1089xf32>
    %10 = arith.addf %0, %9 : vector<2x1089xf32>
    %cst_5 = arith.constant 1.000000e+00 : f32
    %11 = vector.broadcast %cst_5 : f32 to vector<2x1089xf32>
    %12 = arith.mulf %10, %11 : vector<2x1089xf32>
    %cst_6 = arith.constant dense<0xFF800000> : vector<2xf32>
    %13 = vector.multi_reduction <maximumf>, %12, %cst_6 [1] : vector<2x1089xf32> to vector<2xf32>
    %14 = vector.shape_cast %13 : vector<2xf32> to vector<2x1xf32>
    %15 = vector.broadcast %14 : vector<2x1xf32> to vector<2x1089xf32>
    %16 = arith.subf %12, %15 : vector<2x1089xf32>
    %17 = math.exp %16 : vector<2x1089xf32>
    %cst_7 = arith.constant dense<0.000000e+00> : vector<2xf32>
    %18 = vector.multi_reduction <add>, %17, %cst_7 [1] : vector<2x1089xf32> to vector<2xf32>
    %19 = vector.shape_cast %18 : vector<2xf32> to vector<2x1xf32>
    %cst_8 = arith.constant 1.000000e+00 : f32
    %20 = vector.broadcast %cst_8 : f32 to vector<2x1xf32>
    %21 = arith.divf %20, %19 : vector<2x1xf32>
    %22 = vector.broadcast %21 : vector<2x1xf32> to vector<2x1089xf32>
    %23 = arith.mulf %17, %22 : vector<2x1089xf32>
    %cst_9 = arith.constant 1.000000e-10 : f32
    %24 = vector.broadcast %cst_9 : f32 to vector<2x1089xf32>
    %25 = arith.maximumf %23, %24 : vector<2x1089xf32>
    %cst_10 = arith.constant dense<0xFF800000> : vector<2xf32>
    %26 = vector.multi_reduction <maximumf>, %0, %cst_10 [1] : vector<2x1089xf32> to vector<2xf32>
    %27 = vector.shape_cast %26 : vector<2xf32> to vector<2x1xf32>
    %28 = vector.broadcast %27 : vector<2x1xf32> to vector<2x1089xf32>
    %29 = arith.subf %0, %28 : vector<2x1089xf32>
    %30 = math.exp %29 : vector<2x1089xf32>
    %cst_11 = arith.constant dense<0.000000e+00> : vector<2xf32>
    %31 = vector.multi_reduction <add>, %30, %cst_11 [1] : vector<2x1089xf32> to vector<2xf32>
    %32 = vector.shape_cast %31 : vector<2xf32> to vector<2x1xf32>
    %cst_12 = arith.constant 1.000000e+00 : f32
    %33 = vector.broadcast %cst_12 : f32 to vector<2x1xf32>
    %34 = arith.divf %33, %32 : vector<2x1xf32>
    %35 = vector.broadcast %34 : vector<2x1xf32> to vector<2x1089xf32>
    %36 = arith.mulf %30, %35 : vector<2x1089xf32>
    %37 = tpu.iota {dimensions = array<i32: 1>} : vector<2x1089xi32>
    %38 = vector.broadcast %14 : vector<2x1xf32> to vector<2x1089xf32>
    %39 = arith.cmpf oeq, %12, %38 : vector<2x1089xf32>
    %c1089_i32 = arith.constant 1089 : i32
    %40 = vector.broadcast %c1089_i32 : i32 to vector<2x1089xi32>
    %41 = arith.select %39, %37, %40 : vector<2x1089xi1>, vector<2x1089xi32>
    %cst_13 = arith.constant dense<2147483647> : vector<2xi32>
    %42 = vector.multi_reduction <minsi>, %41, %cst_13 [1] : vector<2x1089xi32> to vector<2xi32>
    %43 = vector.shape_cast %42 : vector<2xi32> to vector<2x1xi32>
    %44 = vector.broadcast %43 : vector<2x1xi32> to vector<2x1089xi32>
    %45 = arith.cmpi eq, %37, %44 : vector<2x1089xi32>
    %46 = arith.extui %45 : vector<2x1089xi1> to vector<2x1089xi32>
    %47 = arith.sitofp %46 : vector<2x1089xi32> to vector<2x1089xf32>
    %48 = arith.sitofp %43 : vector<2x1xi32> to vector<2x1xf32>
    %cst_14 = arith.constant 5.000000e-01 : f32
    %49 = vector.broadcast %cst_14 : f32 to vector<2x1xf32>
    %50 = arith.addf %48, %49 : vector<2x1xf32>
    %cst_15 = arith.constant 0.0303030312 : f32
    %51 = vector.broadcast %cst_15 : f32 to vector<2x1xf32>
    %52 = arith.mulf %50, %51 : vector<2x1xf32>
    %53 = math.floor %52 : vector<2x1xf32>
    %cst_16 = arith.constant 3.300000e+01 : f32
    %54 = vector.broadcast %cst_16 : f32 to vector<2x1xf32>
    %55 = arith.mulf %53, %54 : vector<2x1xf32>
    %56 = arith.subf %48, %55 : vector<2x1xf32>
    %cst_17 = arith.constant 1.600000e+01 : f32
    %57 = vector.broadcast %cst_17 : f32 to vector<2x1xf32>
    %58 = arith.subf %56, %57 : vector<2x1xf32>
    %c0_18 = arith.constant 0 : index
    %c0_19 = arith.constant 0 : index
    %59 = vector.load %arg3[%c0_18, %c0_19] : memref<2x2xf32, #tpu.memory_space<vmem>>, vector<2x1xf32>
    %60 = arith.addf %58, %59 : vector<2x1xf32>
    %cst_20 = arith.constant 5.000000e-01 : f32
    %61 = vector.broadcast %cst_20 : f32 to vector<2x1xf32>
    %62 = arith.mulf %60, %61 : vector<2x1xf32>
    %cst_21 = arith.constant 1.600000e+01 : f32
    %63 = vector.broadcast %cst_21 : f32 to vector<2x1xf32>
    %64 = arith.subf %53, %63 : vector<2x1xf32>
    %c0_22 = arith.constant 0 : index
    %c1 = arith.constant 1 : index
    %65 = vector.load %arg3[%c0_22, %c1] : memref<2x2xf32, #tpu.memory_space<vmem>>, vector<2x1xf32>
    %66 = arith.addf %64, %65 : vector<2x1xf32>
    %cst_23 = arith.constant 5.000000e-01 : f32
    %67 = vector.broadcast %cst_23 : f32 to vector<2x1xf32>
    %68 = arith.mulf %66, %67 : vector<2x1xf32>
    %c0_24 = arith.constant 0 : index
    %c0_25 = arith.constant 0 : index
    %69 = vector.load %arg4[%c0_24, %c0_25] : memref<2x1089xf32, #tpu.memory_space<vmem>>, vector<2x1089xf32>
    tpu.vector_store %arg4[%c0_24, %c0_25], %47 {strides = array<i32>} : memref<2x1089xf32, #tpu.memory_space<vmem>>, vector<2x1089xf32>,
    %c0_26 = arith.constant 0 : index
    %c0_27 = arith.constant 0 : index
    %70 = vector.load %arg5[%c0_26, %c0_27] : memref<2x1089xf32, #tpu.memory_space<vmem>>, vector<2x1089xf32>
    tpu.vector_store %arg5[%c0_26, %c0_27], %25 {strides = array<i32>} : memref<2x1089xf32, #tpu.memory_space<vmem>>, vector<2x1089xf32>,
    %c0_28 = arith.constant 0 : index
    %c0_29 = arith.constant 0 : index
    %71 = vector.load %arg6[%c0_28, %c0_29] : memref<2x1089xf32, #tpu.memory_space<vmem>>, vector<2x1089xf32>
    tpu.vector_store %arg6[%c0_28, %c0_29], %36 {strides = array<i32>} : memref<2x1089xf32, #tpu.memory_space<vmem>>, vector<2x1089xf32>,
    %c0_30 = arith.constant 0 : index
    %c0_31 = arith.constant 0 : index
    %72 = vector.load %arg7[%c0_30, %c0_31] : memref<2x2xf32, #tpu.memory_space<vmem>>, vector<2x1xf32>
    tpu.vector_store %arg7[%c0_30, %c0_31], %62 {strides = array<i32>} : memref<2x2xf32, #tpu.memory_space<vmem>>, vector<2x1xf32>,
    %c0_32 = arith.constant 0 : index
    %c1_33 = arith.constant 1 : index
    %73 = vector.load %arg7[%c0_32, %c1_33] : memref<2x2xf32, #tpu.memory_space<vmem>>, vector<2x1xf32>
    tpu.vector_store %arg7[%c0_32, %c1_33], %68 {strides = array<i32>} : memref<2x2xf32, #tpu.memory_space<vmem>>, vector<2x1xf32>,
    return
  }
  func.func @transform_0(%arg0: i32) -> (i32, i32) {
    %c0_i32 = arith.constant 0 : i32
    %c0_i32_0 = arith.constant 0 : i32
    return %arg0, %c0_i32 : i32, i32
  }
  func.func @transform_1(%arg0: i32) -> (i32, i32) {
    %c0_i32 = arith.constant 0 : i32
    %c0_i32_0 = arith.constant 0 : i32
    return %arg0, %c0_i32 : i32, i32
  }
  func.func @transform_2(%arg0: i32) -> (i32, i32) {
    %c0_i32 = arith.constant 0 : i32
    %c0_i32_0 = arith.constant 0 : i32
    return %arg0, %c0_i32 : i32, i32
  }
  func.func @transform_3(%arg0: i32) -> (i32, i32) {
    %c0_i32 = arith.constant 0 : i32
    %c0_i32_0 = arith.constant 0 : i32
    return %arg0, %c0_i32 : i32, i32
  }
  func.func @transform_4(%arg0: i32) -> (i32, i32) {
    %c0_i32 = arith.constant 0 : i32
    %c0_i32_0 = arith.constant 0 : i32
    return %arg0, %c0_i32 : i32, i32
  }
  func.func @transform_5(%arg0: i32) -> (i32, i32) {
    %c0_i32 = arith.constant 0 : i32
    %c0_i32_0 = arith.constant 0 : i32
    return %arg0, %c0_i32 : i32, i32
  }
  func.func @transform_6(%arg0: i32) -> (i32, i32) {
    %c0_i32 = arith.constant 0 : i32
    %c0_i32_0 = arith.constant 0 : i32
    return %arg0, %c0_i32 : i32, i32
  }
}

</mosaic_0001>

<llo_original>
// kernel: tpu_custom_call.1
$region0: #{tpu_custom_call.1}
  #allocation0 [shape = 'u32[]', space=smem, size = 0x4, offset = 0x4, fixed_abs, tag = 'smem constant byte address 0x4 - core index']
  #allocation1 [shape = 'u32[144,128]{1,0:T(1,128)}', space=vmem, size = 0x12000, scoped, tag = 'internal scratch']
  %s0 = inlined_call_operand.hbm [shape: f32[2,1089], index: 0, kind: input, shape index: {}]
  %s1 = inlined_call_operand.hbm [shape: f32[2,1089], index: 1, kind: input, shape index: {}]
  %s2 = inlined_call_operand.vmem [shape: f32[2,2], index: 2, kind: input, shape index: {}]
  %s3 = inlined_call_operand.hbm [shape: f32[2,1089], index: 3, kind: output, shape index: {0}]
  %s4 = inlined_call_operand.hbm [shape: f32[2,1089], index: 4, kind: output, shape index: {1}]
  %s5 = inlined_call_operand.hbm [shape: f32[2,1089], index: 5, kind: output, shape index: {2}]
  %s6 = inlined_call_operand.hbm [shape: f32[2,2], index: 6, kind: output, shape index: {3}]
  %7 = xla_tuple %s3, %s4, %s5, %s6
  %s8 = sld [smem:[#allocation0]]
  $region54: #{tpu_custom_call.1} parent=0
    _
  %s10 = ssub.s32 1, %s8
  %s11 = scalar_select 0, %s10, %s8
  $region1: #{tpu_custom_call.1} parent=0
    #allocation2 [shape = 'u8[9216]{0}', space=vmem, size = 0x2400, scoped, tag = 'input window, operand 0, single buffered']
    #allocation3 [shape = 's32[1]{0}', space=sflag, size = 0x4, scoped, tag = 'scoped memory for tpu_custom_call.1']
    #allocation4 [shape = 's32[1]{0}', space=sflag, size = 0x4, scoped, tag = 'scoped memory for tpu_custom_call.1']
    #allocation5 [shape = 'u8[9216]{0}', space=vmem, size = 0x2400, scoped, tag = 'input window, operand 1, single buffered']
    #allocation6 [shape = 's32[1]{0}', space=sflag, size = 0x4, scoped, tag = 'scoped memory for tpu_custom_call.1']
    #allocation7 [shape = 'u8[9216]{0}', space=vmem, size = 0x2400, scoped, tag = 'output window, operand 0, single buffered']
    #allocation8 [shape = 'u8[9216]{0}', space=vmem, size = 0x2400, scoped, tag = 'output window, operand 1, single buffered']
    #allocation9 [shape = 's32[1]{0}', space=sflag, size = 0x4, scoped, tag = 'scoped memory for tpu_custom_call.1']
    #allocation10 [shape = 'u8[9216]{0}', space=vmem, size = 0x2400, scoped, tag = 'output window, operand 2, single buffered']
    #allocation11 [shape = 'u8[1024]{0}', space=vmem, size = 0x400, scoped, tag = 'output window, operand 3, single buffered']
    #allocation12 [shape = 's32[1]{0}', space=sflag, size = 0x4, scoped, tag = 'scoped memory for tpu_custom_call.1']
    %12 = vsyncpa [#allocation3], 0
    %13 = vsyncpa [#allocation6], 0
    %14 = vsyncpa [#allocation4], 0
    %15 = vsyncpa [#allocation9], 0
    %16 = vsyncpa [#allocation12], 0
    // Predicated region
    $region2: #{tpu_custom_call.1} parent=1 // pred_check
      _
    $region3: #{tpu_custom_call.1} parent=1 // pred_check_branch
      %18 = sbr.rel (0) target = $region5
    $region4: #{tpu_custom_call.1} parent=1 // pred_region
      %s20 = ssub.s32 288, 288
      %21 = vsyncadd [#allocation3], %s20
      %s23 = sshll.u32 [#allocation2], 4
      %s24 = int_to_ptr.vmem [resolvable:$true] %s23
      %26 = dma.hbm_to_vmem [thread:$0]  %s0, 288, %s24, [#allocation3]
    $region5: #{tpu_custom_call.1} parent=1 // pred_fallthru
      _
    // Predicated region
    $region6: #{tpu_custom_call.1} parent=1 // pred_check
      _
    $region7: #{tpu_custom_call.1} parent=1 // pred_check_branch
      %28 = sbr.rel (0) target = $region9
    $region8: #{tpu_custom_call.1} parent=1 // pred_region
      %s30 = ssub.s32 288, 288
      %31 = vsyncadd [#allocation6], %s30
      %s33 = sshll.u32 [#allocation5], 4
      %s34 = int_to_ptr.vmem [resolvable:$true] %s33
      %36 = dma.hbm_to_vmem [thread:$0]  %s1, 288, %s34, [#allocation6]
    $region9: #{tpu_custom_call.1} parent=1 // pred_fallthru
      _
    // Predicated region
    $region10: #{tpu_custom_call.1} parent=1 // pred_check
      _
    $region11: #{tpu_custom_call.1} parent=1 // pred_check_branch
      %38 = sbr.rel (0) target = $region13
    $region12: #{tpu_custom_call.1} parent=1 // pred_region
      _
    $region13: #{tpu_custom_call.1} parent=1 // pred_fallthru
      _
    // Predicated region
    $region14: #{tpu_custom_call.1} parent=1 // pred_check
      _
    $region15: #{tpu_custom_call.1} parent=1 // pred_check_branch
      %40 = sbr.rel (0) target = $region17
    $region16: #{tpu_custom_call.1} parent=1 // pred_region
      %41 = dma.done [#allocation3], 288
    $region17: #{tpu_custom_call.1} parent=1 // pred_fallthru
      _
    // Predicated region
    $region18: #{tpu_custom_call.1} parent=1 // pred_check
      _
    $region19: #{tpu_custom_call.1} parent=1 // pred_check_branch
      %43 = sbr.rel (0) target = $region21
    $region20: #{tpu_custom_call.1} parent=1 // pred_region
      %44 = dma.done [#allocation6], 288
    $region21: #{tpu_custom_call.1} parent=1 // pred_fallthru
      _
    %v45 = vld [vmem:[#allocation2] sm:$0xff]
    %v46 = vld [vmem:[#allocation2 + $0x8] sm:$0xff]
    %v47 = vld [vmem:[#allocation2 + $0x10] sm:$0x3]
    %v48 = vld [vmem:[#allocation5] sm:$0xff]
    %v49 = vld [vmem:[#allocation5 + $0x8] sm:$0xff]
    %v50 = vld [vmem:[#allocation5 + $0x10] sm:$0x3]
    %v51 = vadd.f32 %v48, 1e-10
    %v52 = vadd.f32 %v49, 1e-10
    %v53 = vadd.f32 %v50, 1e-10
    %v54 = vlog2.pop %v51
    %v55 = vmul.f32 %v54, 0.6931472
    %v56 = vlog2.pop %v52
    %v57 = vmul.f32 %v56, 0.6931472
    %v58 = vlog2.pop %v53
    %v59 = vmul.f32 %v58, 0.6931472
    %v60 = vsub.f32 1e-10, %v55
    %v61 = vsub.f32 1e-10, %v57
    %v62 = vsub.f32 1e-10, %v59
    %v63 = vlog2.pop %v60
    %v64 = vmul.f32 %v63, 0.6931472
    %v65 = vlog2.pop %v61
    %v66 = vmul.f32 %v65, 0.6931472
    %v67 = vlog2.pop %v62
    %v68 = vmul.f32 %v67, 0.6931472
    %v69 = vsub.f32 0.0, %v64
    %v70 = vsub.f32 0.0, %v66
    %v71 = vsub.f32 0.0, %v68
    %v72 = vadd.f32 %v45, %v69
    %v73 = vadd.f32 %v46, %v70
    %v74 = vadd.f32 %v47, %v71
    %v78 = vcombine.high %v72, %v72
    %v80 = vunpack.c.l.s4 1983009808
    %v81 = vunpack.c.0.s8 %v80
    %v82 = vlaneseq
    %v83 = vshrl.u32 %v82, 7
    %v84 = vsub.s32 %v81, %v83
    %v85 = vrot.slane %v72, %v84
    %v87 = vunpack.c.l.s4 1983009808
    %v88 = vunpack.c.0.s8 %v87
    %v89 = vlaneseq
    %v90 = vshrl.u32 %v89, 7
    %v91 = vsub.s32 %v88, %v90
    %v92 = vrot.slane %v78, %v91
    %v93 = vcombine.high %v85, %v85
    %v94 = vcombine.high %v92, %v92
    %v95 = vcombine.high %v73, %v73
    %v97 = vunpack.c.l.s4 1983009808
    %v98 = vunpack.c.0.s8 %v97
    %v99 = vlaneseq
    %v100 = vshrl.u32 %v99, 7
    %v101 = vsub.s32 %v98, %v100
    %v102 = vrot.slane %v73, %v101
    %v104 = vunpack.c.l.s4 1983009808
    %v105 = vunpack.c.0.s8 %v104
    %v106 = vlaneseq
    %v107 = vshrl.u32 %v106, 7
    %v108 = vsub.s32 %v105, %v107
    %v109 = vrot.slane %v95, %v108
    %v110 = vcombine.high %v102, %v102
    %v111 = vcombine.high %v109, %v109
    %v113 = vunpack.c.l.s4 1983009808
    %v114 = vunpack.c.0.s8 %v113
    %v115 = vlaneseq
    %v116 = vshrl.u32 %v115, 7
    %v117 = vsub.s32 %v114, %v116
    %v118 = vrot.slane %v74, %v117
    %vm128 = vcmask 1041408
    %v129 = vsel %vm128, %v85, -inf
    %v130 = vsel %vm128, %v93, -inf
    %v131 = vsel %vm128, %v92, -inf
    %v132 = vsel %vm128, %v94, -inf
    %v133 = vsel %vm128, %v102, -inf
    %v134 = vmax.f32 %v129, %v133
    %v135 = vsel %vm128, %v110, -inf
    %v136 = vmax.f32 %v130, %v135
    %v137 = vsel %vm128, %v109, -inf
    %v138 = vmax.f32 %v131, %v137
    %v139 = vsel %vm128, %v111, -inf
    %v140 = vmax.f32 %v132, %v139
    %vm141 = vcmask 525312
    %v142 = vsel %vm141, %v118, -inf
    %v143 = vmax.f32 %v134, %v142
    %v144 = vmax.f32 %v143, %v136
    %v145 = vmax.f32 %v138, %v140
    %v146 = vmax.f32 %v144, %v145
    %147 = vmax.xlane.f32.xlu0 %v146
    %v148 = vpop.xlane.xlu0 %147
    %v151 = vunpack.c.l.s4 269488144
    %v152 = vunpack.c.0.s8 %v151
    %v153 = vlaneseq
    %v154 = vshrl.u32 %v153, 7
    %v155 = vsub.s32 %v152, %v154
    %v156 = vrot.slane %v148, %v155
    %v158 = vsub.f32 %v72, %v156
    %v159 = vsub.f32 %v73, %v156
    %v160 = vsub.f32 %v74, %v156
    %v161 = vmul.f32 %v158, 1.442695
    %v162 = vpow.pop %v161
    %v163 = vmul.f32 %v159, 1.442695
    %v164 = vpow.pop %v163
    %v165 = vmul.f32 %v160, 1.442695
    %v166 = vpow.pop %v165
    %v170 = vcombine.high %v162, %v162
    %v172 = vunpack.c.l.s4 1983009808
    %v173 = vunpack.c.0.s8 %v172
    %v174 = vlaneseq
    %v175 = vshrl.u32 %v174, 7
    %v176 = vsub.s32 %v173, %v175
    %v177 = vrot.slane %v162, %v176
    %v179 = vunpack.c.l.s4 1983009808
    %v180 = vunpack.c.0.s8 %v179
    %v181 = vlaneseq
    %v182 = vshrl.u32 %v181, 7
    %v183 = vsub.s32 %v180, %v182
    %v184 = vrot.slane %v170, %v183
    %v185 = vcombine.high %v177, %v177
    %v186 = vcombine.high %v184, %v184
    %v187 = vcombine.high %v164, %v164
    %v189 = vunpack.c.l.s4 1983009808
    %v190 = vunpack.c.0.s8 %v189
    %v191 = vlaneseq
    %v192 = vshrl.u32 %v191, 7
    %v193 = vsub.s32 %v190, %v192
    %v194 = vrot.slane %v164, %v193
    %v196 = vunpack.c.l.s4 1983009808
    %v197 = vunpack.c.0.s8 %v196
    %v198 = vlaneseq
    %v199 = vshrl.u32 %v198, 7
    %v200 = vsub.s32 %v197, %v199
    %v201 = vrot.slane %v187, %v200
    %v202 = vcombine.high %v194, %v194
    %v203 = vcombine.high %v201, %v201
    %v205 = vunpack.c.l.s4 1983009808
    %v206 = vunpack.c.0.s8 %v205
    %v207 = vlaneseq
    %v208 = vshrl.u32 %v207, 7
    %v209 = vsub.s32 %v206, %v208
    %v210 = vrot.slane %v166, %v209
    %v220 = vsel %vm128, %v177, 0.0
    %v221 = vsel %vm128, %v185, 0.0
    %v222 = vadd.f32 %v220, %v221
    %v223 = vsel %vm128, %v184, 0.0
    %v224 = vadd.f32 %v222, %v223
    %v225 = vsel %vm128, %v186, 0.0
    %v226 = vadd.f32 %v224, %v225
    %v227 = vsel %vm128, %v194, 0.0
    %v228 = vadd.f32 %v226, %v227
    %v229 = vsel %vm128, %v202, 0.0
    %v230 = vadd.f32 %v228, %v229
    %v231 = vsel %vm128, %v201, 0.0
    %v232 = vadd.f32 %v230, %v231
    %v233 = vsel %vm128, %v203, 0.0
    %v234 = vadd.f32 %v232, %v233
    %v235 = vsel %vm141, %v210, 0.0
    %v236 = vadd.f32 %v234, %v235
    %237 = vadd.xlane.f32.xlu0 %v236
    %v238 = vpop.xlane.xlu0 %237
    %v239 = vrcp.pop %v238
    %v240 = vmul.f32 1.0, %v239
    %v243 = vunpack.c.l.s4 269488144
    %v244 = vunpack.c.0.s8 %v243
    %v245 = vlaneseq
    %v246 = vshrl.u32 %v245, 7
    %v247 = vsub.s32 %v244, %v246
    %v248 = vrot.slane %v240, %v247
    %v250 = vmul.f32 %v162, %v248
    %v251 = vmul.f32 %v164, %v248
    %v252 = vmul.f32 %v166, %v248
    %v253 = vmax.f32 %v250, 1e-10
    %v254 = vmax.f32 %v251, 1e-10
    %v255 = vmax.f32 %v252, 1e-10
    %v259 = vcombine.high %v45, %v45
    %v261 = vunpack.c.l.s4 1983009808
    %v262 = vunpack.c.0.s8 %v261
    %v263 = vlaneseq
    %v264 = vshrl.u32 %v263, 7
    %v265 = vsub.s32 %v262, %v264
    %v266 = vrot.slane %v45, %v265
    %v268 = vunpack.c.l.s4 1983009808
    %v269 = vunpack.c.0.s8 %v268
    %v270 = vlaneseq
    %v271 = vshrl.u32 %v270, 7
    %v272 = vsub.s32 %v269, %v271
    %v273 = vrot.slane %v259, %v272
    %v274 = vcombine.high %v266, %v266
    %v275 = vcombine.high %v273, %v273
    %v276 = vcombine.high %v46, %v46
    %v278 = vunpack.c.l.s4 1983009808
    %v279 = vunpack.c.0.s8 %v278
    %v280 = vlaneseq
    %v281 = vshrl.u32 %v280, 7
    %v282 = vsub.s32 %v279, %v281
    %v283 = vrot.slane %v46, %v282
    %v285 = vunpack.c.l.s4 1983009808
    %v286 = vunpack.c.0.s8 %v285
    %v287 = vlaneseq
    %v288 = vshrl.u32 %v287, 7
    %v289 = vsub.s32 %v286, %v288
    %v290 = vrot.slane %v276, %v289
    %v291 = vcombine.high %v283, %v283
    %v292 = vcombine.high %v290, %v290
    %v294 = vunpack.c.l.s4 1983009808
    %v295 = vunpack.c.0.s8 %v294
    %v296 = vlaneseq
    %v297 = vshrl.u32 %v296, 7
    %v298 = vsub.s32 %v295, %v297
    %v299 = vrot.slane %v47, %v298
    %v309 = vsel %vm128, %v266, -inf
    %v310 = vsel %vm128, %v274, -inf
    %v311 = vsel %vm128, %v273, -inf
    %v312 = vsel %vm128, %v275, -inf
    %v313 = vsel %vm128, %v283, -inf
    %v314 = vmax.f32 %v309, %v313
    %v315 = vsel %vm128, %v291, -inf
    %v316 = vmax.f32 %v310, %v315
    %v317 = vsel %vm128, %v290, -inf
    %v318 = vmax.f32 %v311, %v317
    %v319 = vsel %vm128, %v292, -inf
    %v320 = vmax.f32 %v312, %v319
    %v321 = vsel %vm141, %v299, -inf
    %v322 = vmax.f32 %v314, %v321
    %v323 = vmax.f32 %v322, %v316
    %v324 = vmax.f32 %v318, %v320
    %v325 = vmax.f32 %v323, %v324
    %326 = vmax.xlane.f32.xlu0 %v325
    %v327 = vpop.xlane.xlu0 %326
    %v330 = vunpack.c.l.s4 269488144
    %v331 = vunpack.c.0.s8 %v330
    %v332 = vlaneseq
    %v333 = vshrl.u32 %v332, 7
    %v334 = vsub.s32 %v331, %v333
    %v335 = vrot.slane %v327, %v334
    %v337 = vsub.f32 %v45, %v335
    %v338 = vsub.f32 %v46, %v335
    %v339 = vsub.f32 %v47, %v335
    %v340 = vmul.f32 %v337, 1.442695
    %v341 = vpow.pop %v340
    %v342 = vmul.f32 %v338, 1.442695
    %v343 = vpow.pop %v342
    %v344 = vmul.f32 %v339, 1.442695
    %v345 = vpow.pop %v344
    %v349 = vcombine.high %v341, %v341
    %v351 = vunpack.c.l.s4 1983009808
    %v352 = vunpack.c.0.s8 %v351
    %v353 = vlaneseq
    %v354 = vshrl.u32 %v353, 7
    %v355 = vsub.s32 %v352, %v354
    %v356 = vrot.slane %v341, %v355
    %v358 = vunpack.c.l.s4 1983009808
    %v359 = vunpack.c.0.s8 %v358
    %v360 = vlaneseq
    %v361 = vshrl.u32 %v360, 7
    %v362 = vsub.s32 %v359, %v361
    %v363 = vrot.slane %v349, %v362
    %v364 = vcombine.high %v356, %v356
    %v365 = vcombine.high %v363, %v363
    %v366 = vcombine.high %v343, %v343
    %v368 = vunpack.c.l.s4 1983009808
    %v369 = vunpack.c.0.s8 %v368
    %v370 = vlaneseq
    %v371 = vshrl.u32 %v370, 7
    %v372 = vsub.s32 %v369, %v371
    %v373 = vrot.slane %v343, %v372
    %v375 = vunpack.c.l.s4 1983009808
    %v376 = vunpack.c.0.s8 %v375
    %v377 = vlaneseq
    %v378 = vshrl.u32 %v377, 7
    %v379 = vsub.s32 %v376, %v378
    %v380 = vrot.slane %v366, %v379
    %v381 = vcombine.high %v373, %v373
    %v382 = vcombine.high %v380, %v380
    %v384 = vunpack.c.l.s4 1983009808
    %v385 = vunpack.c.0.s8 %v384
    %v386 = vlaneseq
    %v387 = vshrl.u32 %v386, 7
    %v388 = vsub.s32 %v385, %v387
    %v389 = vrot.slane %v345, %v388
    %v399 = vsel %vm128, %v356, 0.0
    %v400 = vsel %vm128, %v364, 0.0
    %v401 = vadd.f32 %v399, %v400
    %v402 = vsel %vm128, %v363, 0.0
    %v403 = vadd.f32 %v401, %v402
    %v404 = vsel %vm128, %v365, 0.0
    %v405 = vadd.f32 %v403, %v404
    %v406 = vsel %vm128, %v373, 0.0
    %v407 = vadd.f32 %v405, %v406
    %v408 = vsel %vm128, %v381, 0.0
    %v409 = vadd.f32 %v407, %v408
    %v410 = vsel %vm128, %v380, 0.0
    %v411 = vadd.f32 %v409, %v410
    %v412 = vsel %vm128, %v382, 0.0
    %v413 = vadd.f32 %v411, %v412
    %v414 = vsel %vm141, %v389, 0.0
    %v415 = vadd.f32 %v413, %v414
    %416 = vadd.xlane.f32.xlu0 %v415
    %v417 = vpop.xlane.xlu0 %416
    %v418 = vrcp.pop %v417
    %v419 = vmul.f32 1.0, %v418
    %v422 = vunpack.c.l.s4 269488144
    %v423 = vunpack.c.0.s8 %v422
    %v424 = vlaneseq
    %v425 = vshrl.u32 %v424, 7
    %v426 = vsub.s32 %v423, %v425
    %v427 = vrot.slane %v419, %v426
    %v429 = vmul.f32 %v341, %v427
    %v430 = vmul.f32 %v343, %v427
    %v431 = vmul.f32 %v345, %v427
    %v432 = vlaneseq
    %v433 = vand.u32 %v432, 127
    %v434 = vadd.s32 %v433, 128
    %v435 = vadd.s32 %v433, 256
    %v436 = vadd.s32 %v433, 384
    %v437 = vadd.s32 %v433, 512
    %v438 = vadd.s32 %v433, 640
    %v439 = vadd.s32 %v433, 768
    %v440 = vadd.s32 %v433, 896
    %v441 = vadd.s32 %v433, 1024
    %vm442 = vcmp.eq.f32.partialorder %v72, %v156
    %vm443 = vcmp.eq.f32.partialorder %v73, %v156
    %vm444 = vcmp.eq.f32.partialorder %v74, %v156
    %v445 = vcombine.low %v433, %v434
    %v446 = vcombine.low %v435, %v436
    %v448 = vunpack.c.l.s4 1983009808
    %v449 = vunpack.c.0.s8 %v448
    %v450 = vlaneseq
    %v451 = vshrl.u32 %v450, 7
    %v452 = vsub.s32 %v449, %v451
    %v453 = vrot.slane %v445, %v452
    %v455 = vunpack.c.l.s4 1983009808
    %v456 = vunpack.c.0.s8 %v455
    %v457 = vlaneseq
    %v458 = vshrl.u32 %v457, 7
    %v459 = vsub.s32 %v456, %v458
    %v460 = vrot.slane %v446, %v459
    %v461 = vcombine.low %v453, %v460
    %v462 = vcombine.low %v437, %v438
    %v463 = vcombine.low %v439, %v440
    %v465 = vunpack.c.l.s4 1983009808
    %v466 = vunpack.c.0.s8 %v465
    %v467 = vlaneseq
    %v468 = vshrl.u32 %v467, 7
    %v469 = vsub.s32 %v466, %v468
    %v470 = vrot.slane %v462, %v469
    %v472 = vunpack.c.l.s4 1983009808
    %v473 = vunpack.c.0.s8 %v472
    %v474 = vlaneseq
    %v475 = vshrl.u32 %v474, 7
    %v476 = vsub.s32 %v473, %v475
    %v477 = vrot.slane %v463, %v476
    %v478 = vcombine.low %v470, %v477
    %v480 = vunpack.c.l.s4 1983009808
    %v481 = vunpack.c.0.s8 %v480
    %v482 = vlaneseq
    %v483 = vshrl.u32 %v482, 7
    %v484 = vsub.s32 %v481, %v483
    %v485 = vrot.slane %v441, %v484
    %v486 = vsel %vm442, %v461, 1089
    %v487 = vsel %vm443, %v478, 1089
    %v488 = vsel %vm444, %v485, 1089
    %v489 = vcombine.high %v486, %v486
    %v491 = vunpack.c.l.s4 1983009808
    %v492 = vunpack.c.0.s8 %v491
    %v493 = vlaneseq
    %v494 = vshrl.u32 %v493, 7
    %v495 = vsub.s32 %v492, %v494
    %v496 = vrot.slane %v486, %v495
    %v498 = vunpack.c.l.s4 1983009808
    %v499 = vunpack.c.0.s8 %v498
    %v500 = vlaneseq
    %v501 = vshrl.u32 %v500, 7
    %v502 = vsub.s32 %v499, %v501
    %v503 = vrot.slane %v489, %v502
    %v504 = vcombine.high %v496, %v496
    %v505 = vcombine.high %v503, %v503
    %v506 = vcombine.high %v487, %v487
    %v508 = vunpack.c.l.s4 1983009808
    %v509 = vunpack.c.0.s8 %v508
    %v510 = vlaneseq
    %v511 = vshrl.u32 %v510, 7
    %v512 = vsub.s32 %v509, %v511
    %v513 = vrot.slane %v487, %v512
    %v515 = vunpack.c.l.s4 1983009808
    %v516 = vunpack.c.0.s8 %v515
    %v517 = vlaneseq
    %v518 = vshrl.u32 %v517, 7
    %v519 = vsub.s32 %v516, %v518
    %v520 = vrot.slane %v506, %v519
    %v521 = vcombine.high %v513, %v513
    %v522 = vcombine.high %v520, %v520
    %v524 = vunpack.c.l.s4 1983009808
    %v525 = vunpack.c.0.s8 %v524
    %v526 = vlaneseq
    %v527 = vshrl.u32 %v526, 7
    %v528 = vsub.s32 %v525, %v527
    %v529 = vrot.slane %v488, %v528
    %v530 = vsel %vm128, %v496, 2147483647
    %v531 = vsel %vm128, %v504, 2147483647
    %v532 = vsel %vm128, %v503, 2147483647
    %v533 = vsel %vm128, %v505, 2147483647
    %v534 = vsel %vm128, %v513, 2147483647
    %vm535 = vcmp.lt.s32.totalorder %v530, %v534
    %v536 = vsel %vm535, %v530, %v534
    %v537 = vsel %vm128, %v521, 2147483647
    %vm538 = vcmp.lt.s32.totalorder %v531, %v537
    %v539 = vsel %vm538, %v531, %v537
    %v540 = vsel %vm128, %v520, 2147483647
    %vm541 = vcmp.lt.s32.totalorder %v532, %v540
    %v542 = vsel %vm541, %v532, %v540
    %v543 = vsel %vm128, %v522, 2147483647
    %vm544 = vcmp.lt.s32.totalorder %v533, %v543
    %v545 = vsel %vm544, %v533, %v543
    %v546 = vsel %vm141, %v529, 2147483647
    %vm547 = vcmp.lt.s32.totalorder %v536, %v546
    %v548 = vsel %vm547, %v536, %v546
    %vm549 = vcmp.lt.s32.totalorder %v548, %v539
    %v550 = vsel %vm549, %v548, %v539
    %vm551 = vcmp.lt.s32.totalorder %v542, %v545
    %v552 = vsel %vm551, %v542, %v545
    %vm553 = vcmp.lt.s32.totalorder %v550, %v552
    %v554 = vsel %vm553, %v550, %v552
    %v555 = vand.u32 %v554, 65535
    %v556 = vshra.s32 %v554, 16
    %v557 = vcvt.s32.f32 %v555
    %v558 = vcvt.s32.f32 %v556
    %559 = vmin.xlane.f32.xlu0 %v558
    %v560 = vpop.xlane.xlu0 %559
    %vm561 = vcmp.eq.f32.partialorder %v558, %v560
    %v562 = vsel %vm561, %v557, inf
    %563 = vmin.xlane.f32.xlu0 %v562
    %v564 = vpop.xlane.xlu0 %563
    %v565 = vcvt.f32.s32 %v564
    %v566 = vcvt.f32.s32 %v560
    %v567 = vshll.u32 %v566, 16
    %v568 = vadd.s32 %v567, %v565
    %vm569 = vcmp.eq.s32.totalorder %v433, %v568
    %vm570 = vcmp.eq.s32.totalorder %v434, %v568
    %vm571 = vcmp.eq.s32.totalorder %v435, %v568
    %vm572 = vcmp.eq.s32.totalorder %v436, %v568
    %vm573 = vcmp.eq.s32.totalorder %v437, %v568
    %vm574 = vcmp.eq.s32.totalorder %v438, %v568
    %vm575 = vcmp.eq.s32.totalorder %v439, %v568
    %vm576 = vcmp.eq.s32.totalorder %v440, %v568
    %vm577 = vcmp.eq.s32.totalorder %v441, %v568
    %v578 = vsel %vm569, 1, 0
    %v579 = vsel %vm570, 1, 0
    %v580 = vsel %vm571, 1, 0
    %v581 = vsel %vm572, 1, 0
    %v582 = vsel %vm573, 1, 0
    %v583 = vsel %vm574, 1, 0
    %v584 = vsel %vm575, 1, 0
    %v585 = vsel %vm576, 1, 0
    %v586 = vsel %vm577, 1, 0
    %v587 = vcvt.s32.f32 %v578
    %v588 = vcvt.s32.f32 %v579
    %v589 = vcvt.s32.f32 %v580
    %v590 = vcvt.s32.f32 %v581
    %v591 = vcvt.s32.f32 %v582
    %v592 = vcvt.s32.f32 %v583
    %v593 = vcvt.s32.f32 %v584
    %v594 = vcvt.s32.f32 %v585
    %v595 = vcvt.s32.f32 %v586
    %v596 = vcvt.s32.f32 %v568
    %v597 = vadd.f32 %v596, 0.5
    %v598 = vmul.f32 %v597, 0.030303031
    %v599 = vfloor.f32 %v598
    %v600 = vmul.f32 %v599, 33.0
    %v601 = vsub.f32 %v596, %v600
    %v602 = vsub.f32 %v601, 16.0
    %v603 = vld [vmem:[%s2] sm:$0x3]
    %v604 = vadd.f32 %v602, %v603
    %v605 = vmul.f32 %v604, 0.5
    %v606 = vsub.f32 %v599, 16.0
    %v607 = vadd.f32 %v606, %v603
    %v608 = vmul.f32 %v607, 0.5
    %v618 = vcombine.low %v587, %v588
    %v619 = vcombine.low %v589, %v590
    %v621 = vunpack.c.l.s4 1983009808
    %v622 = vunpack.c.0.s8 %v621
    %v623 = vlaneseq
    %v624 = vshrl.u32 %v623, 7
    %v625 = vsub.s32 %v622, %v624
    %v626 = vrot.slane %v618, %v625
    %v628 = vunpack.c.l.s4 1983009808
    %v629 = vunpack.c.0.s8 %v628
    %v630 = vlaneseq
    %v631 = vshrl.u32 %v630, 7
    %v632 = vsub.s32 %v629, %v631
    %v633 = vrot.slane %v619, %v632
    %v634 = vcombine.low %v626, %v633
    %v635 = vcombine.low %v591, %v592
    %v636 = vcombine.low %v593, %v594
    %v638 = vunpack.c.l.s4 1983009808
    %v639 = vunpack.c.0.s8 %v638
    %v640 = vlaneseq
    %v641 = vshrl.u32 %v640, 7
    %v642 = vsub.s32 %v639, %v641
    %v643 = vrot.slane %v635, %v642
    %v645 = vunpack.c.l.s4 1983009808
    %v646 = vunpack.c.0.s8 %v645
    %v647 = vlaneseq
    %v648 = vshrl.u32 %v647, 7
    %v649 = vsub.s32 %v646, %v648
    %v650 = vrot.slane %v636, %v649
    %v651 = vcombine.low %v643, %v650
    %v653 = vunpack.c.l.s4 1983009808
    %v654 = vunpack.c.0.s8 %v653
    %v655 = vlaneseq
    %v656 = vshrl.u32 %v655, 7
    %v657 = vsub.s32 %v654, %v656
    %v658 = vrot.slane %v595, %v657
    %662 = vst [vmem:[#allocation7] sm:$0xff] %v634
    %663 = vst [vmem:[#allocation7 + $0x8] sm:$0xff] %v651
    %664 = vst.msk [vmem:[#allocation7 + $0x10] sm:$0x3] %vm141, %v658
    %665 = vst [vmem:[#allocation8] sm:$0xff] %v253
    %666 = vst [vmem:[#allocation8 + $0x8] sm:$0xff] %v254
    %667 = vst.msk [vmem:[#allocation8 + $0x10] sm:$0x3] %vm141, %v255
    %668 = vst [vmem:[#allocation10] sm:$0xff] %v429
    %669 = vst [vmem:[#allocation10 + $0x8] sm:$0xff] %v430
    %670 = vst.msk [vmem:[#allocation10 + $0x10] sm:$0x3] %vm141, %v431
    %vm671 = vcmask 1024
    %672 = vst.msk [vmem:[#allocation11] sm:$0x3] %vm671, %v605
    %vm673 = vcmask 9224
    %674 = vst.msk [vmem:[#allocation11] sm:$0x3] %vm673, %v608
    // Predicated region
    $region22: #{tpu_custom_call.1} parent=1 // pred_check
      _
    $region23: #{tpu_custom_call.1} parent=1 // pred_check_branch
      %676 = sbr.rel (0) target = $region25
    $region24: #{tpu_custom_call.1} parent=1 // pred_region
      %s678 = ssub.s32 288, 288
      %679 = vsyncadd [#allocation4], %s678
      %s681 = sshll.u32 [#allocation7], 4
      %s682 = int_to_ptr.vmem [resolvable:$true] %s681
      %684 = dma.vmem_to_hbm [thread:$0]  %s682, 288, %s3, [#allocation4]
    $region25: #{tpu_custom_call.1} parent=1 // pred_fallthru
      _
    // Predicated region
    $region26: #{tpu_custom_call.1} parent=1 // pred_check
      _
    $region27: #{tpu_custom_call.1} parent=1 // pred_check_branch
      %686 = sbr.rel (0) target = $region29
    $region28: #{tpu_custom_call.1} parent=1 // pred_region
      %s688 = ssub.s32 288, 288
      %689 = vsyncadd [#allocation9], %s688
      %s691 = sshll.u32 [#allocation8], 4
      %s692 = int_to_ptr.vmem [resolvable:$true] %s691
      %694 = dma.vmem_to_hbm [thread:$0]  %s692, 288, %s4, [#allocation9]
    $region29: #{tpu_custom_call.1} parent=1 // pred_fallthru
      _
    // Predicated region
    $region30: #{tpu_custom_call.1} parent=1 // pred_check
      _
    $region31: #{tpu_custom_call.1} parent=1 // pred_check_branch
      %696 = sbr.rel (0) target = $region33
    $region32: #{tpu_custom_call.1} parent=1 // pred_region
      %s698 = ssub.s32 288, 288
      %699 = vsyncadd [#allocation9], %s698
      %s701 = sshll.u32 [#allocation10], 4
      %s702 = int_to_ptr.vmem [resolvable:$true] %s701
      %704 = dma.vmem_to_hbm [thread:$0]  %s702, 288, %s5, [#allocation9]
    $region33: #{tpu_custom_call.1} parent=1 // pred_fallthru
      _
    // Predicated region
    $region34: #{tpu_custom_call.1} parent=1 // pred_check
      _
    $region35: #{tpu_custom_call.1} parent=1 // pred_check_branch
      %706 = sbr.rel (0) target = $region37
    $region36: #{tpu_custom_call.1} parent=1 // pred_region
      %s708 = ssub.s32 32, 32
      %709 = vsyncadd [#allocation12], %s708
      %s711 = sshll.u32 [#allocation11], 4
      %s712 = int_to_ptr.vmem [resolvable:$true] %s711
      %714 = dma.vmem_to_hbm [thread:$0]  %s712, 32, %s6, [#allocation12]
    $region37: #{tpu_custom_call.1} parent=1 // pred_fallthru
      _
    // Predicated region
    $region38: #{tpu_custom_call.1} parent=1 // pred_check
      _
    $region39: #{tpu_custom_call.1} parent=1 // pred_check_branch
      %716 = sbr.rel (0) target = $region41
    $region40: #{tpu_custom_call.1} parent=1 // pred_region
      %717 = dma.done [#allocation4], 288
    $region41: #{tpu_custom_call.1} parent=1 // pred_fallthru
      _
    // Predicated region
    $region42: #{tpu_custom_call.1} parent=1 // pred_check
      _
    $region43: #{tpu_custom_call.1} parent=1 // pred_check_branch
      %719 = sbr.rel (0) target = $region45
    $region44: #{tpu_custom_call.1} parent=1 // pred_region
      %720 = dma.done [#allocation9], 288
    $region45: #{tpu_custom_call.1} parent=1 // pred_fallthru
      _
    // Predicated region
    $region46: #{tpu_custom_call.1} parent=1 // pred_check
      _
    $region47: #{tpu_custom_call.1} parent=1 // pred_check_branch
      %722 = sbr.rel (0) target = $region49
    $region48: #{tpu_custom_call.1} parent=1 // pred_region
      %723 = dma.done [#allocation9], 288
    $region49: #{tpu_custom_call.1} parent=1 // pred_fallthru
      _
    // Predicated region
    $region50: #{tpu_custom_call.1} parent=1 // pred_check
      _
    $region51: #{tpu_custom_call.1} parent=1 // pred_check_branch
      %725 = sbr.rel (0) target = $region53
    $region52: #{tpu_custom_call.1} parent=1 // pred_region
      %726 = dma.done [#allocation12], 32
    $region53: #{tpu_custom_call.1} parent=1 // pred_fallthru
      _
    %727 = vsyncpa [#allocation3], 1
    %728 = vsyncpa [#allocation6], 1
    %729 = vsyncpa [#allocation4], 1
    %730 = vsyncpa [#allocation9], 1
    %731 = vsyncpa [#allocation12], 1

</llo_original>
